<compile_context>
chip_gen: v5e
topology: v5e:2x2
jax: 0.10.0
libtpu: 0.0.40
codegen_flags: <defaults>
</compile_context>

<pallas_src>
import jax
import jax.numpy as jnp
from jax.experimental import pallas as pl
from jax.experimental.pallas import tpu as pltpu

# --- model dimensions (match classifier/embeddings.py `sizes`) -------------
ELMO_DIM = 1024
GLOVE_DIM = 200
GLOVE_PAD = 256                    # lane-dense padding inside the fused table
OUT_DIM = ELMO_DIM + GLOVE_DIM     # 1224, matches torch.cat(..., dim=2)
VOCAB = 128                        # synthetic vocab size (one-hot / MXU friendly)
CHAR_DIM = 256                     # synthetic "char-CNN" width feeding ELMo proj
FUSED_DIM = ELMO_DIM + GLOVE_PAD   # 1280-wide fused (projection-folded) table


def _tensorcores_per_chip():
    """Best-effort TC-per-chip detection: v5e/v6e expose a single TensorCore,
    other generations (v7x etc.) have two and benefit from an even grid."""
    try:
        kind = jax.devices()[0].device_kind.lower()
    except Exception:
        return 2
    single_core_kinds = ("v5 lite", "v5e", "v5litepod", "v6 lite", "v6e", "v6lite")
    if any(s in kind for s in single_core_kinds):
        return 1
    return 2


def _pick_token_block(n, ncores):
    """Largest MXU/lane-friendly token block.  On multi-TC chips prefer a grid
    length divisible by the core count; on single-TC chips just go as big as
    possible (per-grid-step overhead ~0.35 us)."""
    cands = (1024, 512, 256, 128, 64, 32, 16, 8)
    if ncores > 1:
        for tb in cands:
            if n % tb == 0 and (n // tb) % ncores == 0:
                return tb
    for tb in cands:
        if n % tb == 0:
            return tb
    return n  # full-extent block (legal even if not a multiple of 8)


def _elmo_glove_kernel(ids_ref, tab_ref, bias_ref, out_ref):
    # ids_ref:  (TB, 1) int32 token ids for this block
    # tab_ref:  (VOCAB, FUSED_DIM) bf16 = [elmo_tab @ W_proj | glove zero-pad]
    # bias_ref: (1, ELMO_DIM) f32       = ELMo projection bias
    # out_ref:  (TB, OUT_DIM) f32       = [tanh(elmo_proj + b) | glove]
    ids = ids_ref[...]                                        # (TB, 1)
    tb = ids.shape[0]
    v = tab_ref.shape[0]

    # One-hot gather on the MXU: 0/1 bf16 values select bf16 table rows exactly
    # (single nonzero product per f32 accumulator -> exact).
    # NOTE: ids outside [0, VOCAB) silently yield an all-zero one-hot row.
    iota = jax.lax.broadcasted_iota(jnp.int32, (tb, v), 1)
    onehot = (iota == ids).astype(jnp.bfloat16)               # (TB, V)

    # Single fused lookup+projection: (TB, V) @ (V, 1280) -> f32.
    fused = jnp.dot(onehot, tab_ref[...],
                    preferred_element_type=jnp.float32)       # (TB, FUSED_DIM)

    # ELMo half: bias + tanh (kept f32; v5e has no bf16 EUP and the f32 output
    # contract is preserved).  GloVe half: straight copy of 200 columns.
    out_ref[:, :ELMO_DIM] = jnp.tanh(fused[:, :ELMO_DIM] + bias_ref[...])
    out_ref[:, ELMO_DIM:OUT_DIM] = fused[:, ELMO_DIM:ELMO_DIM + GLOVE_DIM]


def prepare_elmo_glove_params(glove_tab, elmo_tab, w_proj, b_proj):
    """One-time setup (hoisted out of the per-call path): fold the ELMo
    projection into the table, pad GloVe to a lane-dense width, fuse, bf16."""
    elmo_proj = jnp.dot(elmo_tab.astype(jnp.float32),
                        w_proj.astype(jnp.float32))            # (VOCAB, 1024)
    glove_pad = jnp.zeros((VOCAB, GLOVE_PAD), jnp.float32)
    glove_pad = glove_pad.at[:, :GLOVE_DIM].set(glove_tab.astype(jnp.float32))
    fused_tab = jnp.concatenate([elmo_proj, glove_pad],
                                axis=1).astype(jnp.bfloat16)   # (VOCAB, 1280)
    return fused_tab, b_proj.astype(jnp.float32)


def elmo_glove_forward(ids, fused_tab, b_proj):
    """ids: (B, S) int32.  Returns (B, S, 1224) float32."""
    B, S = ids.shape
    N = B * S
    TB = _pick_token_block(N, _tensorcores_per_chip())
    assert N % TB == 0

    ids_flat = ids.reshape(N, 1).astype(jnp.int32)
    grid = (N // TB,)

    # Explicit VMEM budget for large token blocks:
    #   out double-buffer 2*TB*1224*4 B, fused f32 intermediate TB*1280*4 B,
    #   lane-padded ids 2*TB*128*4 B, table+bias ~0.66 MB.
    cp_kwargs = dict(dimension_semantics=("parallel",))
    if TB >= 512:
        cp_kwargs["vmem_limit_bytes"] = 48 * 1024 * 1024

    out = pl.pallas_call(
        _elmo_glove_kernel,
        grid=grid,
        in_specs=[
            pl.BlockSpec((TB, 1), lambda i: (i, 0)),               # ids
            pl.BlockSpec((VOCAB, FUSED_DIM), lambda i: (0, 0)),    # fused table
            pl.BlockSpec((1, ELMO_DIM), lambda i: (0, 0)),         # proj bias
        ],
        out_specs=pl.BlockSpec((TB, OUT_DIM), lambda i: (i, 0)),
        out_shape=jax.ShapeDtypeStruct((N, OUT_DIM), jnp.float32),
        compiler_params=pltpu.CompilerParams(**cp_kwargs),
    )(ids_flat, fused_tab, b_proj)

    return out.reshape(B, S, OUT_DIM)


def _reference(ids, fused_tab, b_proj):
    """Plain-JAX reference of the same synthetic forward (same bf16 table)."""
    tab = fused_tab.astype(jnp.float32)
    elmo_proj_tab = tab[:, :ELMO_DIM]
    glove_tab = tab[:, ELMO_DIM:ELMO_DIM + GLOVE_DIM]
    e = jnp.tanh(elmo_proj_tab[ids] + b_proj[0])               # (B, S, 1024)
    g = glove_tab[ids]                                         # (B, S, 200)
    return jnp.concatenate([e, g], axis=-1)


if __name__ == "__main__":
    key = jax.random.PRNGKey(0)
    k_ids, k_glove, k_elmo, k_w, k_b = jax.random.split(key, 5)

    B, S = 2, 8
    ids = jax.random.randint(k_ids, (B, S), 0, VOCAB, dtype=jnp.int32)

    # Deterministic synthetic "pretrained" parameters.
    glove_tab = jax.random.normal(k_glove, (VOCAB, GLOVE_DIM), jnp.float32) * 0.1
    elmo_tab = jax.random.normal(k_elmo, (VOCAB, CHAR_DIM), jnp.float32) * 0.1
    w_proj = jax.random.normal(k_w, (CHAR_DIM, ELMO_DIM), jnp.float32) * 0.05
    b_proj = jax.random.normal(k_b, (1, ELMO_DIM), jnp.float32) * 0.01

    # One-time table fusion / projection folding / bf16 cast (off the hot path).
    fused_tab, b_proj_f32 = prepare_elmo_glove_params(
        glove_tab, elmo_tab, w_proj, b_proj)

    out = elmo_glove_forward(ids, fused_tab, b_proj_f32)
    out = jax.block_until_ready(out)

    assert out.shape == (B, S, OUT_DIM), out.shape
    assert out.dtype == jnp.float32

    ref = _reference(ids, fused_tab, b_proj_f32)
    assert jnp.allclose(out, ref, atol=1e-4, rtol=1e-4), "mismatch vs reference"

    print("KERNEL_OK")
</pallas_src>

<mosaic_0001>
module attributes {stable_mosaic.version = 11 : i64} {
  func.func @_elmo_glove_kernel(%arg0: i32, %arg1: memref<8x1xi32, #tpu.memory_space<vmem>>, %arg2: memref<128x1280xbf16, #tpu.memory_space<vmem>>, %arg3: memref<1x1024xf32, #tpu.memory_space<vmem>>, %arg4: memref<8x1224xf32, #tpu.memory_space<vmem>>) attributes {dimension_semantics = [#tpu.dimension_semantics<parallel>], iteration_bounds = array<i64: 2>, scalar_prefetch = 0 : i64, scratch_operands = 0 : i64, tpu.core_type = #tpu.core_type<tc>, window_params = [{transform_indices = @transform_0, window_bounds = array<i64: 8, 1>}, {pipeline_mode = #tpu.pipeline_mode<synchronous>, transform_indices = @transform_1, window_bounds = array<i64: 128, 1280>}, {pipeline_mode = #tpu.pipeline_mode<synchronous>, transform_indices = @transform_2, window_bounds = array<i64: 1, 1024>}, {transform_indices = @transform_3, window_bounds = array<i64: 8, 1224>}]} {
    %c0 = arith.constant 0 : index
    %c0_0 = arith.constant 0 : index
    %0 = vector.load %arg1[%c0, %c0_0] : memref<8x1xi32, #tpu.memory_space<vmem>>, vector<8x1xi32>
    %1 = tpu.iota {dimensions = array<i32: 1>} : vector<8x128xi32>
    %2 = vector.broadcast %0 : vector<8x1xi32> to vector<8x128xi32>
    %3 = arith.cmpi eq, %1, %2 : vector<8x128xi32>
    %4 = arith.extui %3 : vector<8x128xi1> to vector<8x128xi32>
    %5 = arith.sitofp %4 : vector<8x128xi32> to vector<8x128xf32>
    %6 = arith.truncf %5 : vector<8x128xf32> to vector<8x128xbf16>
    %c0_1 = arith.constant 0 : index
    %c0_2 = arith.constant 0 : index
    %7 = vector.load %arg2[%c0_1, %c0_2] : memref<128x1280xbf16, #tpu.memory_space<vmem>>, vector<128x1280xbf16>
    %cst = arith.constant dense<0.000000e+00> : vector<8x1280xf32>
    %8 = tpu.matmul %6, %7, %cst {dimension_numbers = #tpu.dot_dimension_numbers<[1], [0], [0], [1], [0, 0, 1, 1], [], []>} : vector<8x128xbf16>, vector<128x1280xbf16>, vector<8x1280xf32> -> vector<8x1280xf32>
    %9 = vector.extract_strided_slice %8 {offsets = [0, 0], sizes = [8, 1024], strides = [1, 1]} : vector<8x1280xf32> to vector<8x1024xf32>
    %c0_3 = arith.constant 0 : index
    %c0_4 = arith.constant 0 : index
    %10 = vector.load %arg3[%c0_3, %c0_4] : memref<1x1024xf32, #tpu.memory_space<vmem>>, vector<1x1024xf32>
    %11 = vector.broadcast %10 : vector<1x1024xf32> to vector<8x1024xf32>
    %12 = arith.addf %9, %11 : vector<8x1024xf32>
    %13 = math.tanh %12 : vector<8x1024xf32>
    %c0_5 = arith.constant 0 : index
    %c0_6 = arith.constant 0 : index
    %14 = vector.load %arg4[%c0_5, %c0_6] : memref<8x1224xf32, #tpu.memory_space<vmem>>, vector<8x1024xf32>
    tpu.vector_store %arg4[%c0_5, %c0_6], %13 {strides = array<i32>} : memref<8x1224xf32, #tpu.memory_space<vmem>>, vector<8x1024xf32>,
    %15 = vector.extract_strided_slice %8 {offsets = [0, 1024], sizes = [8, 200], strides = [1, 1]} : vector<8x1280xf32> to vector<8x200xf32>
    %c0_7 = arith.constant 0 : index
    %c1024 = arith.constant 1024 : index
    %16 = vector.load %arg4[%c0_7, %c1024] : memref<8x1224xf32, #tpu.memory_space<vmem>>, vector<8x200xf32>
    tpu.vector_store %arg4[%c0_7, %c1024], %15 {strides = array<i32>} : memref<8x1224xf32, #tpu.memory_space<vmem>>, vector<8x200xf32>,
    return
  }
  func.func @transform_0(%arg0: i32) -> (i32, i32) {
    %c0_i32 = arith.constant 0 : i32
    %c0_i32_0 = arith.constant 0 : i32
    return %arg0, %c0_i32 : i32, i32
  }
  func.func @transform_1(%arg0: i32) -> (i32, i32) {
    %c0_i32 = arith.constant 0 : i32
    %c0_i32_0 = arith.constant 0 : i32
    %c0_i32_1 = arith.constant 0 : i32
    return %c0_i32, %c0_i32_0 : i32, i32
  }
  func.func @transform_2(%arg0: i32) -> (i32, i32) {
    %c0_i32 = arith.constant 0 : i32
    %c0_i32_0 = arith.constant 0 : i32
    %c0_i32_1 = arith.constant 0 : i32
    return %c0_i32, %c0_i32_0 : i32, i32
  }
  func.func @transform_3(%arg0: i32) -> (i32, i32) {
    %c0_i32 = arith.constant 0 : i32
    %c0_i32_0 = arith.constant 0 : i32
    return %arg0, %c0_i32 : i32, i32
  }
}

</mosaic_0001>

<llo_original>
// kernel: tpu_custom_call.1
$region0: #{tpu_custom_call.1}
  #allocation0 [shape = 'u32[]', space=smem, size = 0x4, offset = 0x4, fixed_abs, tag = 'smem constant byte address 0x4 - core index']
  #allocation1 [shape = 'u32[72,128]{1,0:T(1,128)}', space=vmem, size = 0x9000, scoped, tag = 'internal scratch']
  %s0 = inlined_call_operand.vmem [shape: s32[16,1], index: 0, kind: input, shape index: {}]
  %s1 = inlined_call_operand.hbm [shape: bf16[128,1280], index: 1, kind: input, shape index: {}]
  %s2 = inlined_call_operand.vmem [shape: f32[1,1024], index: 2, kind: input, shape index: {}]
  %s3 = inlined_call_operand.hbm [shape: f32[16,1224], index: 3, kind: output, shape index: {}]
  %s4 = sld [smem:[#allocation0]]
  $region49: #{tpu_custom_call.1} parent=0
    _
  %s6 = ssub.s32 1, %s4
  %s7 = scalar_select 0, %s6, %s4
  $region1: #{tpu_custom_call.1} parent=0
    #allocation2 [shape = 'u8[327680]{0}', space=vmem, size = 0x50000, scoped, tag = 'input window, operand 1, single buffered']
    #allocation3 [shape = 's32[2]{0}', space=sflag, size = 0x8, scoped, tag = 'scoped memory for tpu_custom_call.1']
    #allocation4 [shape = 's32[2]{0}', space=sflag, size = 0x8, scoped, tag = 'scoped memory for tpu_custom_call.1']
    #allocation5 [shape = 'u8[81920]{0}', space=vmem, size = 0x14000, scoped, tag = 'output window, operand 0']
    %8 = vsyncpa [#allocation3], 0
    %9 = vsyncpa [#allocation4], 0
    %s10 = scalar_lea.sflag [#allocation4], 1
    %11 = vsyncpa %s10, 0
    loop: start=0, step=1, limit=4
    $region2: #{tpu_custom_call.1} parent=1 // loop_pre_header
      _
    $region3: #{tpu_custom_call.1} parent=1 // loop_header
      %s13 = sphi 0, %s17
      %p14 = scmp.ge.s32.totalorder %s13, 4
      %s23 = sphi 0, %s25
      %s26 = sphi 0, %s23
      %s27 = sphi 0, %s26
      %s43 = sphi 0, %s27
      %s47 = sphi 0, %s47
      %s49 = sphi 0, %s47
      %s50 = sphi 0, %s49
      %s64 = sphi 0, %s50
      %s68 = sphi 0, %s68
      %s70 = sphi 0, %s68
      %s71 = sphi 0, %s70
      %s85 = sphi 0, %s71
      %s91 = sphi 0, %s93
      %s94 = sphi 0, %s91
      %s95 = sphi 0, %s94
      %s111 = sphi 0, %s95
    $region4: #{tpu_custom_call.1} parent=1 // loop_header_branch
      %16 = sbr.rel (%p14) target = $region8
    $region5: #{tpu_custom_call.1} parent=1 // loop_body
      %s18 = ssub.s32 %s13, 1
      %s19 = ssub.s32 %s13, 2
      %s20 = sadd.s32 %s13, 1
      %s21 = ssub.s32 %s13, %s20
      %p22 = scmp.eq.s32.totalorder %s21, 0
      %s24 = sadd.s32 %s23, 1
      %s25 = scalar_select %p22, %s23, %s24
      %p28 = pneg %p22
      %p29 = scmp.eq.s32.totalorder %s13, 1
      %p30 = por %p28, %p29
      %p31 = scmp.ne.s32.totalorder %s23, %s26
      %p32 = scmp.eq.s32.totalorder %s13, 0
      %p33 = por %p31, %p32
      %p34 = scmp.ne.s32.totalorder %s23, %s26
      %p35 = scmp.eq.s32.totalorder %s18, 1
      %p36 = por %p34, %p35
      %p37 = scmp.ne.s32.totalorder %s26, %s27
      %p38 = scmp.eq.s32.totalorder %s18, 0
      %p39 = por %p37, %p38
      %p40 = scmp.ne.s32.totalorder %s26, %s27
      %p41 = scmp.eq.s32.totalorder %s19, 1
      %p42 = por %p40, %p41
      %p44 = scmp.ne.s32.totalorder %s27, %s43
      %p45 = scmp.eq.s32.totalorder %s19, 0
      %p46 = por %p44, %p45
      %s48 = sadd.s32 %s47, 1
      %p51 = scmp.eq.s32.totalorder %s13, 1
      %p52 = scmp.ne.s32.totalorder %s47, %s49
      %p53 = scmp.eq.s32.totalorder %s13, 0
      %p54 = por %p52, %p53
      %p55 = scmp.ne.s32.totalorder %s47, %s49
      %p56 = scmp.eq.s32.totalorder %s18, 1
      %p57 = por %p55, %p56
      %p58 = scmp.ne.s32.totalorder %s49, %s50
      %p59 = scmp.eq.s32.totalorder %s18, 0
      %p60 = por %p58, %p59
      %p61 = scmp.ne.s32.totalorder %s49, %s50
      %p62 = scmp.eq.s32.totalorder %s19, 1
      %p63 = por %p61, %p62
      %p65 = scmp.ne.s32.totalorder %s50, %s64
      %p66 = scmp.eq.s32.totalorder %s19, 0
      %p67 = por %p65, %p66
      %s69 = sadd.s32 %s68, 1
      %p72 = scmp.eq.s32.totalorder %s13, 1
      %p73 = scmp.ne.s32.totalorder %s68, %s70
      %p74 = scmp.eq.s32.totalorder %s13, 0
      %p75 = por %p73, %p74
      %p76 = scmp.ne.s32.totalorder %s68, %s70
      %p77 = scmp.eq.s32.totalorder %s18, 1
      %p78 = por %p76, %p77
      %p79 = scmp.ne.s32.totalorder %s70, %s71
      %p80 = scmp.eq.s32.totalorder %s18, 0
      %p81 = por %p79, %p80
      %p82 = scmp.ne.s32.totalorder %s70, %s71
      %p83 = scmp.eq.s32.totalorder %s19, 1
      %p84 = por %p82, %p83
      %p86 = scmp.ne.s32.totalorder %s71, %s85
      %p87 = scmp.eq.s32.totalorder %s19, 0
      %p88 = por %p86, %p87
      %s89 = ssub.s32 %s13, %s20
      %p90 = scmp.eq.s32.totalorder %s89, 0
      %s92 = sadd.s32 %s91, 1
      %s93 = scalar_select %p90, %s91, %s92
      %p96 = pneg %p90
      %p97 = scmp.eq.s32.totalorder %s13, 1
      %p98 = por %p96, %p97
      %p99 = scmp.ne.s32.totalorder %s91, %s94
      %p100 = scmp.eq.s32.totalorder %s13, 0
      %p101 = por %p99, %p100
      %p102 = scmp.ne.s32.totalorder %s91, %s94
      %p103 = scmp.eq.s32.totalorder %s18, 1
      %p104 = por %p102, %p103
      %p105 = scmp.ne.s32.totalorder %s94, %s95
      %p106 = scmp.eq.s32.totalorder %s18, 0
      %p107 = por %p105, %p106
      %p108 = scmp.ne.s32.totalorder %s94, %s95
      %p109 = scmp.eq.s32.totalorder %s19, 1
      %p110 = por %p108, %p109
      %p112 = scmp.ne.s32.totalorder %s95, %s111
      %p113 = scmp.eq.s32.totalorder %s19, 0
      %p114 = por %p112, %p113
      %p115 = scmp.le.s32.totalorder 1, %s13
      %p116 = scmp.lt.s32.totalorder %s13, 3
      %p117 = pnand %p115, %p116
      %p118 = pneg %p117
      // Predicated region
      $region9: #{tpu_custom_call.1} parent=5 // pred_check
        _
      $region10: #{tpu_custom_call.1} parent=5 // pred_check_branch
        %120 = sbr.rel (%p117) target = $region12
      $region11: #{tpu_custom_call.1} parent=5 // pred_region
        %s121 = ssub.s32 %s13, 1
        // Predicated region
        $region13: #{tpu_custom_call.1} parent=11 // pred_check
          %p122 = pneg %p60
        $region14: #{tpu_custom_call.1} parent=11 // pred_check_branch
          %124 = sbr.rel (%p122) target = $region16
        $region15: #{tpu_custom_call.1} parent=11 // pred_region
          %126 = vsyncadd [#allocation3], 0
          %s127 = sshll.u32 %s1, 4
          %s128 = int_to_ptr.hbm [resolvable:$true] %s127
          %s129 = sshll.u32 [#allocation2], 4
          %s130 = int_to_ptr.vmem [resolvable:$true] %s129
          %135 = dma.hbm_to_vmem [thread:$0]  %s128, 10240, %s130, [#allocation3], 640, 640, 40
        $region16: #{tpu_custom_call.1} parent=11 // pred_fallthru
          _
        // Predicated region
        $region17: #{tpu_custom_call.1} parent=11 // pred_check
          %p136 = pneg %p81
        $region18: #{tpu_custom_call.1} parent=11 // pred_check_branch
          %138 = sbr.rel (%p136) target = $region20
        $region19: #{tpu_custom_call.1} parent=11 // pred_region
          _
        $region20: #{tpu_custom_call.1} parent=11 // pred_fallthru
          _
      $region12: #{tpu_custom_call.1} parent=5 // pred_fallthru
        _
      %p139 = scmp.lt.s32.totalorder %s13, 2
      // Predicated region
      $region21: #{tpu_custom_call.1} parent=5 // pred_check
        %p140 = pneg %p139
      $region22: #{tpu_custom_call.1} parent=5 // pred_check_branch
        %142 = sbr.rel (%p140) target = $region24
      $region23: #{tpu_custom_call.1} parent=5 // pred_region
        // Predicated region
        $region25: #{tpu_custom_call.1} parent=23 // pred_check
          %p143 = pneg %p33
        $region26: #{tpu_custom_call.1} parent=23 // pred_check_branch
          %145 = sbr.rel (%p143) target = $region28
        $region27: #{tpu_custom_call.1} parent=23 // pred_region
          %p146 = scmp.lt.s32.totalorder %s13, 1
          %s147 = scalar_select %p146, %s13, 1
          %s148 = smul.addr %s147, 8
          %s149 = scalar_lea.vmem %s0, %s148
        $region28: #{tpu_custom_call.1} parent=23 // pred_fallthru
          _
      $region24: #{tpu_custom_call.1} parent=5 // pred_fallthru
        _
      %p150 = scmp.le.s32.totalorder 1, %s13
      %p151 = scmp.lt.s32.totalorder %s13, 3
      %p152 = pnand %p150, %p151
      %p153 = pneg %p152
      // Predicated region
      $region29: #{tpu_custom_call.1} parent=5 // pred_check
        _
      $region30: #{tpu_custom_call.1} parent=5 // pred_check_branch
        %155 = sbr.rel (%p152) target = $region32
      $region31: #{tpu_custom_call.1} parent=5 // pred_region
        %s156 = ssub.s32 %s13, 1
        // Predicated region
        $region33: #{tpu_custom_call.1} parent=31 // pred_check
          %p157 = pneg %p60
        $region34: #{tpu_custom_call.1} parent=31 // pred_check_branch
          %159 = sbr.rel (%p157) target = $region36
        $region35: #{tpu_custom_call.1} parent=31 // pred_region
          %161 = dma.done [#allocation3], 10240
        $region36: #{tpu_custom_call.1} parent=31 // pred_fallthru
          _
        %p162 = scmp.lt.s32.totalorder %s18, 1
        %s163 = scalar_select %p162, %s18, 1
        %s164 = smul.addr %s163, 8
        %s165 = scalar_lea.vmem %s0, %s164
        %p166 = pneg %p39
        %p167 = pneg %p36
        %p168 = pneg %p60
        %p169 = pneg %p57
        %p170 = pneg %p81
        %p171 = pneg %p78
        %p172 = pneg %p107
        %p173 = pneg %p104
        %s174 = sand.u32 %s94, 1
        %s175 = scalar_lea.sflag [#allocation4], %s174
        %s176 = sand.u32 %s94, 1
        %s177 = smul.addr %s176, 80
        %s178 = scalar_lea.vmem [#allocation5], %s177
        %p179 = scmp.lt.s32.totalorder %s18, 1
        %s180 = scalar_select %p179, %s18, 1
        %s181 = smul.addr %s180, 8
        %s182 = scalar_lea.vmem %s0, %s181
        %v183 = vld [vmem:[%s182] sm:$0xff]
        %v184 = vlaneseq
        %v185 = vand.u32 %v184, 127
        %186 = vset.pattern.permute.xlu0 0
        %187 = vperm.xlu0 %186, %v183
        %v188 = vpop.permute.xlu0 %187
        %vm189 = vcmp.eq.s32.totalorder %v185, %v188
        %v190 = vsel %vm189, 1, 0
        %v191 = vcvt.s32.f32 %v190
        %v192 = vpack.c.bf16 %v191, %v191
        %v193 = vld [vmem:[#allocation2] sm:$0xff]
        %v194 = vld [vmem:[#allocation2 + $0x8] sm:$0xff]
        %v195 = vld [vmem:[#allocation2 + $0x10] sm:$0xff]
        %v196 = vld [vmem:[#allocation2 + $0x18] sm:$0xff]
        %v197 = vld [vmem:[#allocation2 + $0x20] sm:$0xff]
        %v198 = vld [vmem:[#allocation2 + $0x28] sm:$0xff]
        %v199 = vld [vmem:[#allocation2 + $0x30] sm:$0xff]
        %v200 = vld [vmem:[#allocation2 + $0x38] sm:$0xff]
        %v201 = vld [vmem:[#allocation2 + $0x40] sm:$0xff]
        %v202 = vld [vmem:[#allocation2 + $0x48] sm:$0xff]
        %v203 = vld [vmem:[#allocation2 + $0x50] sm:$0xff]
        %v204 = vld [vmem:[#allocation2 + $0x58] sm:$0xff]
        %v205 = vld [vmem:[#allocation2 + $0x60] sm:$0xff]
        %v206 = vld [vmem:[#allocation2 + $0x68] sm:$0xff]
        %v207 = vld [vmem:[#allocation2 + $0x70] sm:$0xff]
        %v208 = vld [vmem:[#allocation2 + $0x78] sm:$0xff]
        %v209 = vld [vmem:[#allocation2 + $0x80] sm:$0xff]
        %v210 = vld [vmem:[#allocation2 + $0x88] sm:$0xff]
        %v211 = vld [vmem:[#allocation2 + $0x90] sm:$0xff]
        %v212 = vld [vmem:[#allocation2 + $0x98] sm:$0xff]
        %v213 = vld [vmem:[#allocation2 + $0xa0] sm:$0xff]
        %v214 = vld [vmem:[#allocation2 + $0xa8] sm:$0xff]
        %v215 = vld [vmem:[#allocation2 + $0xb0] sm:$0xff]
        %v216 = vld [vmem:[#allocation2 + $0xb8] sm:$0xff]
        %v217 = vld [vmem:[#allocation2 + $0xc0] sm:$0xff]
        %v218 = vld [vmem:[#allocation2 + $0xc8] sm:$0xff]
        %v219 = vld [vmem:[#allocation2 + $0xd0] sm:$0xff]
        %v220 = vld [vmem:[#allocation2 + $0xd8] sm:$0xff]
        %v221 = vld [vmem:[#allocation2 + $0xe0] sm:$0xff]
        %v222 = vld [vmem:[#allocation2 + $0xe8] sm:$0xff]
        %v223 = vld [vmem:[#allocation2 + $0xf0] sm:$0xff]
        %v224 = vld [vmem:[#allocation2 + $0xf8] sm:$0xff]
        %v225 = vld [vmem:[#allocation2 + $0x100] sm:$0xff]
        %v226 = vld [vmem:[#allocation2 + $0x108] sm:$0xff]
        %v227 = vld [vmem:[#allocation2 + $0x110] sm:$0xff]
        %v228 = vld [vmem:[#allocation2 + $0x118] sm:$0xff]
        %v229 = vld [vmem:[#allocation2 + $0x120] sm:$0xff]
        %v230 = vld [vmem:[#allocation2 + $0x128] sm:$0xff]
        %v231 = vld [vmem:[#allocation2 + $0x130] sm:$0xff]
        %v232 = vld [vmem:[#allocation2 + $0x138] sm:$0xff]
        %v233 = vld [vmem:[#allocation2 + $0x140] sm:$0xff]
        %v234 = vld [vmem:[#allocation2 + $0x148] sm:$0xff]
        %v235 = vld [vmem:[#allocation2 + $0x150] sm:$0xff]
        %v236 = vld [vmem:[#allocation2 + $0x158] sm:$0xff]
        %v237 = vld [vmem:[#allocation2 + $0x160] sm:$0xff]
        %v238 = vld [vmem:[#allocation2 + $0x168] sm:$0xff]
        %v239 = vld [vmem:[#allocation2 + $0x170] sm:$0xff]
        %v240 = vld [vmem:[#allocation2 + $0x178] sm:$0xff]
        %v241 = vld [vmem:[#allocation2 + $0x180] sm:$0xff]
        %v242 = vld [vmem:[#allocation2 + $0x188] sm:$0xff]
        %v243 = vld [vmem:[#allocation2 + $0x190] sm:$0xff]
        %v244 = vld [vmem:[#allocation2 + $0x198] sm:$0xff]
        %v245 = vld [vmem:[#allocation2 + $0x1a0] sm:$0xff]
        %v246 = vld [vmem:[#allocation2 + $0x1a8] sm:$0xff]
        %v247 = vld [vmem:[#allocation2 + $0x1b0] sm:$0xff]
        %v248 = vld [vmem:[#allocation2 + $0x1b8] sm:$0xff]
        %v249 = vld [vmem:[#allocation2 + $0x1c0] sm:$0xff]
        %v250 = vld [vmem:[#allocation2 + $0x1c8] sm:$0xff]
        %v251 = vld [vmem:[#allocation2 + $0x1d0] sm:$0xff]
        %v252 = vld [vmem:[#allocation2 + $0x1d8] sm:$0xff]
        %v253 = vld [vmem:[#allocation2 + $0x1e0] sm:$0xff]
        %v254 = vld [vmem:[#allocation2 + $0x1e8] sm:$0xff]
        %v255 = vld [vmem:[#allocation2 + $0x1f0] sm:$0xff]
        %v256 = vld [vmem:[#allocation2 + $0x1f8] sm:$0xff]
        %v257 = vld [vmem:[#allocation2 + $0x200] sm:$0xff]
        %v258 = vld [vmem:[#allocation2 + $0x208] sm:$0xff]
        %v259 = vld [vmem:[#allocation2 + $0x210] sm:$0xff]
        %v260 = vld [vmem:[#allocation2 + $0x218] sm:$0xff]
        %v261 = vld [vmem:[#allocation2 + $0x220] sm:$0xff]
        %v262 = vld [vmem:[#allocation2 + $0x228] sm:$0xff]
        %v263 = vld [vmem:[#allocation2 + $0x230] sm:$0xff]
        %v264 = vld [vmem:[#allocation2 + $0x238] sm:$0xff]
        %v265 = vld [vmem:[#allocation2 + $0x240] sm:$0xff]
        %v266 = vld [vmem:[#allocation2 + $0x248] sm:$0xff]
        %v267 = vld [vmem:[#allocation2 + $0x250] sm:$0xff]
        %v268 = vld [vmem:[#allocation2 + $0x258] sm:$0xff]
        %v269 = vld [vmem:[#allocation2 + $0x260] sm:$0xff]
        %v270 = vld [vmem:[#allocation2 + $0x268] sm:$0xff]
        %v271 = vld [vmem:[#allocation2 + $0x270] sm:$0xff]
        %v272 = vld [vmem:[#allocation2 + $0x278] sm:$0xff]
        %v353 = vunpack.c.l.b16 %v193
        %v354 = vunpack.c.h.b16 %v193
        %v355 = vunpack.c.l.b16 %v194
        %v356 = vunpack.c.h.b16 %v194
        %v357 = vunpack.c.l.b16 %v195
        %v358 = vunpack.c.h.b16 %v195
        %v359 = vunpack.c.l.b16 %v196
        %v360 = vunpack.c.h.b16 %v196
        %v361 = vunpack.c.l.b16 %v197
        %v362 = vunpack.c.h.b16 %v197
        %v363 = vunpack.c.l.b16 %v198
        %v364 = vunpack.c.h.b16 %v198
        %v365 = vunpack.c.l.b16 %v199
        %v366 = vunpack.c.h.b16 %v199
        %v367 = vunpack.c.l.b16 %v200
        %v368 = vunpack.c.h.b16 %v200
        %v369 = vunpack.c.l.b16 %v201
        %v370 = vunpack.c.h.b16 %v201
        %v371 = vunpack.c.l.b16 %v202
        %v372 = vunpack.c.h.b16 %v202
        %v373 = vunpack.c.l.b16 %v203
        %v374 = vunpack.c.h.b16 %v203
        %v375 = vunpack.c.l.b16 %v204
        %v376 = vunpack.c.h.b16 %v204
        %v377 = vunpack.c.l.b16 %v205
        %v378 = vunpack.c.h.b16 %v205
        %v379 = vunpack.c.l.b16 %v206
        %v380 = vunpack.c.h.b16 %v206
        %v381 = vunpack.c.l.b16 %v207
        %v382 = vunpack.c.h.b16 %v207
        %v383 = vunpack.c.l.b16 %v208
        %v384 = vunpack.c.h.b16 %v208
        %v385 = vunpack.c.l.b16 %v209
        %v386 = vunpack.c.h.b16 %v209
        %v387 = vunpack.c.l.b16 %v210
        %v388 = vunpack.c.h.b16 %v210
        %v389 = vunpack.c.l.b16 %v211
        %v390 = vunpack.c.h.b16 %v211
        %v391 = vunpack.c.l.b16 %v212
        %v392 = vunpack.c.h.b16 %v212
        %v393 = vunpack.c.l.b16 %v213
        %v394 = vunpack.c.h.b16 %v213
        %v395 = vunpack.c.l.b16 %v214
        %v396 = vunpack.c.h.b16 %v214
        %v397 = vunpack.c.l.b16 %v215
        %v398 = vunpack.c.h.b16 %v215
        %v399 = vunpack.c.l.b16 %v216
        %v400 = vunpack.c.h.b16 %v216
        %v401 = vunpack.c.l.b16 %v217
        %v402 = vunpack.c.h.b16 %v217
        %v403 = vunpack.c.l.b16 %v218
        %v404 = vunpack.c.h.b16 %v218
        %v405 = vunpack.c.l.b16 %v219
        %v406 = vunpack.c.h.b16 %v219
        %v407 = vunpack.c.l.b16 %v220
        %v408 = vunpack.c.h.b16 %v220
        %v409 = vunpack.c.l.b16 %v221
        %v410 = vunpack.c.h.b16 %v221
        %v411 = vunpack.c.l.b16 %v222
        %v412 = vunpack.c.h.b16 %v222
        %v413 = vunpack.c.l.b16 %v223
        %v414 = vunpack.c.h.b16 %v223
        %v415 = vunpack.c.l.b16 %v224
        %v416 = vunpack.c.h.b16 %v224
        %v417 = vunpack.c.l.b16 %v225
        %v418 = vunpack.c.h.b16 %v225
        %v419 = vunpack.c.l.b16 %v226
        %v420 = vunpack.c.h.b16 %v226
        %v421 = vunpack.c.l.b16 %v227
        %v422 = vunpack.c.h.b16 %v227
        %v423 = vunpack.c.l.b16 %v228
        %v424 = vunpack.c.h.b16 %v228
        %v425 = vunpack.c.l.b16 %v229
        %v426 = vunpack.c.h.b16 %v229
        %v427 = vunpack.c.l.b16 %v230
        %v428 = vunpack.c.h.b16 %v230
        %v429 = vunpack.c.l.b16 %v231
        %v430 = vunpack.c.h.b16 %v231
        %v431 = vunpack.c.l.b16 %v232
        %v432 = vunpack.c.h.b16 %v232
        %v433 = vunpack.c.l.b16 %v233
        %v434 = vunpack.c.h.b16 %v233
        %v435 = vunpack.c.l.b16 %v234
        %v436 = vunpack.c.h.b16 %v234
        %v437 = vunpack.c.l.b16 %v235
        %v438 = vunpack.c.h.b16 %v235
        %v439 = vunpack.c.l.b16 %v236
        %v440 = vunpack.c.h.b16 %v236
        %v441 = vunpack.c.l.b16 %v237
        %v442 = vunpack.c.h.b16 %v237
        %v443 = vunpack.c.l.b16 %v238
        %v444 = vunpack.c.h.b16 %v238
        %v445 = vunpack.c.l.b16 %v239
        %v446 = vunpack.c.h.b16 %v239
        %v447 = vunpack.c.l.b16 %v240
        %v448 = vunpack.c.h.b16 %v240
        %v449 = vunpack.c.l.b16 %v241
        %v450 = vunpack.c.h.b16 %v241
        %v451 = vunpack.c.l.b16 %v242
        %v452 = vunpack.c.h.b16 %v242
        %v453 = vunpack.c.l.b16 %v243
        %v454 = vunpack.c.h.b16 %v243
        %v455 = vunpack.c.l.b16 %v244
        %v456 = vunpack.c.h.b16 %v244
        %v457 = vunpack.c.l.b16 %v245
        %v458 = vunpack.c.h.b16 %v245
        %v459 = vunpack.c.l.b16 %v246
        %v460 = vunpack.c.h.b16 %v246
        %v461 = vunpack.c.l.b16 %v247
        %v462 = vunpack.c.h.b16 %v247
        %v463 = vunpack.c.l.b16 %v248
        %v464 = vunpack.c.h.b16 %v248
        %v465 = vunpack.c.l.b16 %v249
        %v466 = vunpack.c.h.b16 %v249
        %v467 = vunpack.c.l.b16 %v250
        %v468 = vunpack.c.h.b16 %v250
        %v469 = vunpack.c.l.b16 %v251
        %v470 = vunpack.c.h.b16 %v251
        %v471 = vunpack.c.l.b16 %v252
        %v472 = vunpack.c.h.b16 %v252
        %v473 = vunpack.c.l.b16 %v253
        %v474 = vunpack.c.h.b16 %v253
        %v475 = vunpack.c.l.b16 %v254
        %v476 = vunpack.c.h.b16 %v254
        %v477 = vunpack.c.l.b16 %v255
        %v478 = vunpack.c.h.b16 %v255
        %v479 = vunpack.c.l.b16 %v256
        %v480 = vunpack.c.h.b16 %v256
        %v481 = vunpack.c.l.b16 %v257
        %v482 = vunpack.c.h.b16 %v257
        %v483 = vunpack.c.l.b16 %v258
        %v484 = vunpack.c.h.b16 %v258
        %v485 = vunpack.c.l.b16 %v259
        %v486 = vunpack.c.h.b16 %v259
        %v487 = vunpack.c.l.b16 %v260
        %v488 = vunpack.c.h.b16 %v260
        %v489 = vunpack.c.l.b16 %v261
        %v490 = vunpack.c.h.b16 %v261
        %v491 = vunpack.c.l.b16 %v262
        %v492 = vunpack.c.h.b16 %v262
        %v493 = vunpack.c.l.b16 %v263
        %v494 = vunpack.c.h.b16 %v263
        %v495 = vunpack.c.l.b16 %v264
        %v496 = vunpack.c.h.b16 %v264
        %v497 = vunpack.c.l.b16 %v265
        %v498 = vunpack.c.h.b16 %v265
        %v499 = vunpack.c.l.b16 %v266
        %v500 = vunpack.c.h.b16 %v266
        %v501 = vunpack.c.l.b16 %v267
        %v502 = vunpack.c.h.b16 %v267
        %v503 = vunpack.c.l.b16 %v268
        %v504 = vunpack.c.h.b16 %v268
        %v505 = vunpack.c.l.b16 %v269
        %v506 = vunpack.c.h.b16 %v269
        %v507 = vunpack.c.l.b16 %v270
        %v508 = vunpack.c.h.b16 %v270
        %v509 = vunpack.c.l.b16 %v271
        %v510 = vunpack.c.h.b16 %v271
        %v511 = vunpack.c.l.b16 %v272
        %v512 = vunpack.c.h.b16 %v272
        %v513 = vpack.c.b16 %v363, %v353
        %v514 = vpack.c.b16 %v364, %v354
        %v515 = vpack.c.b16 %v365, %v355
        %v516 = vpack.c.b16 %v366, %v356
        %v517 = vpack.c.b16 %v367, %v357
        %v518 = vpack.c.b16 %v368, %v358
        %v519 = vpack.c.b16 %v369, %v359
        %v520 = vpack.c.b16 %v370, %v360
        %v521 = vpack.c.b16 %v371, %v361
        %v522 = vpack.c.b16 %v372, %v362
        %v523 = vpack.c.b16 %v383, %v373
        %v524 = vpack.c.b16 %v384, %v374
        %v525 = vpack.c.b16 %v385, %v375
        %v526 = vpack.c.b16 %v386, %v376
        %v527 = vpack.c.b16 %v387, %v377
        %v528 = vpack.c.b16 %v388, %v378
        %v529 = vpack.c.b16 %v389, %v379
        %v530 = vpack.c.b16 %v390, %v380
        %v531 = vpack.c.b16 %v391, %v381
        %v532 = vpack.c.b16 %v392, %v382
        %v533 = vpack.c.b16 %v403, %v393
        %v534 = vpack.c.b16 %v404, %v394
        %v535 = vpack.c.b16 %v405, %v395
        %v536 = vpack.c.b16 %v406, %v396
        %v537 = vpack.c.b16 %v407, %v397
        %v538 = vpack.c.b16 %v408, %v398
        %v539 = vpack.c.b16 %v409, %v399
        %v540 = vpack.c.b16 %v410, %v400
        %v541 = vpack.c.b16 %v411, %v401
        %v542 = vpack.c.b16 %v412, %v402
        %v543 = vpack.c.b16 %v423, %v413
        %v544 = vpack.c.b16 %v424, %v414
        %v545 = vpack.c.b16 %v425, %v415
        %v546 = vpack.c.b16 %v426, %v416
        %v547 = vpack.c.b16 %v427, %v417
        %v548 = vpack.c.b16 %v428, %v418
        %v549 = vpack.c.b16 %v429, %v419
        %v550 = vpack.c.b16 %v430, %v420
        %v551 = vpack.c.b16 %v431, %v421
        %v552 = vpack.c.b16 %v432, %v422
        %v553 = vpack.c.b16 %v443, %v433
        %v554 = vpack.c.b16 %v444, %v434
        %v555 = vpack.c.b16 %v445, %v435
        %v556 = vpack.c.b16 %v446, %v436
        %v557 = vpack.c.b16 %v447, %v437
        %v558 = vpack.c.b16 %v448, %v438
        %v559 = vpack.c.b16 %v449, %v439
        %v560 = vpack.c.b16 %v450, %v440
        %v561 = vpack.c.b16 %v451, %v441
        %v562 = vpack.c.b16 %v452, %v442
        %v563 = vpack.c.b16 %v463, %v453
        %v564 = vpack.c.b16 %v464, %v454
        %v565 = vpack.c.b16 %v465, %v455
        %v566 = vpack.c.b16 %v466, %v456
        %v567 = vpack.c.b16 %v467, %v457
        %v568 = vpack.c.b16 %v468, %v458
        %v569 = vpack.c.b16 %v469, %v459
        %v570 = vpack.c.b16 %v470, %v460
        %v571 = vpack.c.b16 %v471, %v461
        %v572 = vpack.c.b16 %v472, %v462
        %v573 = vpack.c.b16 %v483, %v473
        %v574 = vpack.c.b16 %v484, %v474
        %v575 = vpack.c.b16 %v485, %v475
        %v576 = vpack.c.b16 %v486, %v476
        %v577 = vpack.c.b16 %v487, %v477
        %v578 = vpack.c.b16 %v488, %v478
        %v579 = vpack.c.b16 %v489, %v479
        %v580 = vpack.c.b16 %v490, %v480
        %v581 = vpack.c.b16 %v491, %v481
        %v582 = vpack.c.b16 %v492, %v482
        %v583 = vpack.c.b16 %v503, %v493
        %v584 = vpack.c.b16 %v504, %v494
        %v585 = vpack.c.b16 %v505, %v495
        %v586 = vpack.c.b16 %v506, %v496
        %v587 = vpack.c.b16 %v507, %v497
        %v588 = vpack.c.b16 %v508, %v498
        %v589 = vpack.c.b16 %v509, %v499
        %v590 = vpack.c.b16 %v510, %v500
        %v591 = vpack.c.b16 %v511, %v501
        %v592 = vpack.c.b16 %v512, %v502
        %673 = vmatpush.bf16.msra.mxu0 %v583
        %674 = vmatpush.bf16.msra.mxu0 %v573
        %675 = vmatpush.bf16.msra.mxu0 %v563
        %676 = vmatpush.bf16.msra.mxu0 %v553
        %677 = vmatpush.bf16.msra.mxu0 %v543
        %678 = vmatpush.bf16.msra.mxu0 %v533
        %679 = vmatpush.bf16.msra.mxu0 %v523
        %680 = vmatpush.bf16.msra.mxu0 %v513
        %681 = vmatmul.bf16.gmra.mxu0 %v192
        %v682 = vpop.f32.mrf.mxu0
        %v683 = vadd.f32 0.0, %v682
        %v684 = vpop.f32.mrf.mxu0
        %685 = vdwg.mxu0
        %686 = vmatpush.bf16.msra.mxu0 %v584
        %687 = vmatpush.bf16.msra.mxu0 %v574
        %688 = vmatpush.bf16.msra.mxu0 %v564
        %689 = vmatpush.bf16.msra.mxu0 %v554
        %690 = vmatpush.bf16.msra.mxu0 %v544
        %691 = vmatpush.bf16.msra.mxu0 %v534
        %692 = vmatpush.bf16.msra.mxu0 %v524
        %693 = vmatpush.bf16.msra.mxu0 %v514
        %694 = vmatmul.bf16.gmra.mxu0 %v192
        %v695 = vpop.f32.mrf.mxu0
        %v696 = vadd.f32 0.0, %v695
        %v697 = vpop.f32.mrf.mxu0
        %698 = vdwg.mxu0
        %699 = vmatpush.bf16.msra.mxu0 %v585
        %700 = vmatpush.bf16.msra.mxu0 %v575
        %701 = vmatpush.bf16.msra.mxu0 %v565
        %702 = vmatpush.bf16.msra.mxu0 %v555
        %703 = vmatpush.bf16.msra.mxu0 %v545
        %704 = vmatpush.bf16.msra.mxu0 %v535
        %705 = vmatpush.bf16.msra.mxu0 %v525
        %706 = vmatpush.bf16.msra.mxu0 %v515
        %707 = vmatmul.bf16.gmra.mxu0 %v192
        %v708 = vpop.f32.mrf.mxu0
        %v709 = vadd.f32 0.0, %v708
        %v710 = vpop.f32.mrf.mxu0
        %711 = vdwg.mxu0
        %712 = vmatpush.bf16.msra.mxu0 %v586
        %713 = vmatpush.bf16.msra.mxu0 %v576
        %714 = vmatpush.bf16.msra.mxu0 %v566
        %715 = vmatpush.bf16.msra.mxu0 %v556
        %716 = vmatpush.bf16.msra.mxu0 %v546
        %717 = vmatpush.bf16.msra.mxu0 %v536
        %718 = vmatpush.bf16.msra.mxu0 %v526
        %719 = vmatpush.bf16.msra.mxu0 %v516
        %720 = vmatmul.bf16.gmra.mxu0 %v192
        %v721 = vpop.f32.mrf.mxu0
        %v722 = vadd.f32 0.0, %v721
        %v723 = vpop.f32.mrf.mxu0
        %724 = vdwg.mxu0
        %725 = vmatpush.bf16.msra.mxu0 %v587
        %726 = vmatpush.bf16.msra.mxu0 %v577
        %727 = vmatpush.bf16.msra.mxu0 %v567
        %728 = vmatpush.bf16.msra.mxu0 %v557
        %729 = vmatpush.bf16.msra.mxu0 %v547
        %730 = vmatpush.bf16.msra.mxu0 %v537
        %731 = vmatpush.bf16.msra.mxu0 %v527
        %732 = vmatpush.bf16.msra.mxu0 %v517
        %733 = vmatmul.bf16.gmra.mxu0 %v192
        %v734 = vpop.f32.mrf.mxu0
        %v735 = vadd.f32 0.0, %v734
        %v736 = vpop.f32.mrf.mxu0
        %737 = vdwg.mxu0
        %738 = vmatpush.bf16.msra.mxu0 %v588
        %739 = vmatpush.bf16.msra.mxu0 %v578
        %740 = vmatpush.bf16.msra.mxu0 %v568
        %741 = vmatpush.bf16.msra.mxu0 %v558
        %742 = vmatpush.bf16.msra.mxu0 %v548
        %743 = vmatpush.bf16.msra.mxu0 %v538
        %744 = vmatpush.bf16.msra.mxu0 %v528
        %745 = vmatpush.bf16.msra.mxu0 %v518
        %746 = vmatmul.bf16.gmra.mxu0 %v192
        %v747 = vpop.f32.mrf.mxu0
        %v748 = vadd.f32 0.0, %v747
        %v749 = vpop.f32.mrf.mxu0
        %750 = vdwg.mxu0
        %751 = vmatpush.bf16.msra.mxu0 %v589
        %752 = vmatpush.bf16.msra.mxu0 %v579
        %753 = vmatpush.bf16.msra.mxu0 %v569
        %754 = vmatpush.bf16.msra.mxu0 %v559
        %755 = vmatpush.bf16.msra.mxu0 %v549
        %756 = vmatpush.bf16.msra.mxu0 %v539
        %757 = vmatpush.bf16.msra.mxu0 %v529
        %758 = vmatpush.bf16.msra.mxu0 %v519
        %759 = vmatmul.bf16.gmra.mxu0 %v192
        %v760 = vpop.f32.mrf.mxu0
        %v761 = vadd.f32 0.0, %v760
        %v762 = vpop.f32.mrf.mxu0
        %763 = vdwg.mxu0
        %764 = vmatpush.bf16.msra.mxu0 %v590
        %765 = vmatpush.bf16.msra.mxu0 %v580
        %766 = vmatpush.bf16.msra.mxu0 %v570
        %767 = vmatpush.bf16.msra.mxu0 %v560
        %768 = vmatpush.bf16.msra.mxu0 %v550
        %769 = vmatpush.bf16.msra.mxu0 %v540
        %770 = vmatpush.bf16.msra.mxu0 %v530
        %771 = vmatpush.bf16.msra.mxu0 %v520
        %772 = vmatmul.bf16.gmra.mxu0 %v192
        %v773 = vpop.f32.mrf.mxu0
        %v774 = vadd.f32 0.0, %v773
        %v775 = vpop.f32.mrf.mxu0
        %776 = vdwg.mxu0
        %777 = vmatpush.bf16.msra.mxu0 %v591
        %778 = vmatpush.bf16.msra.mxu0 %v581
        %779 = vmatpush.bf16.msra.mxu0 %v571
        %780 = vmatpush.bf16.msra.mxu0 %v561
        %781 = vmatpush.bf16.msra.mxu0 %v551
        %782 = vmatpush.bf16.msra.mxu0 %v541
        %783 = vmatpush.bf16.msra.mxu0 %v531
        %784 = vmatpush.bf16.msra.mxu0 %v521
        %785 = vmatmul.bf16.gmra.mxu0 %v192
        %v786 = vpop.f32.mrf.mxu0
        %v787 = vadd.f32 0.0, %v786
        %v788 = vpop.f32.mrf.mxu0
        %789 = vdwg.mxu0
        %790 = vmatpush.bf16.msra.mxu0 %v592
        %791 = vmatpush.bf16.msra.mxu0 %v582
        %792 = vmatpush.bf16.msra.mxu0 %v572
        %793 = vmatpush.bf16.msra.mxu0 %v562
        %794 = vmatpush.bf16.msra.mxu0 %v552
        %795 = vmatpush.bf16.msra.mxu0 %v542
        %796 = vmatpush.bf16.msra.mxu0 %v532
        %797 = vmatpush.bf16.msra.mxu0 %v522
        %798 = vmatmul.bf16.gmra.mxu0 %v192
        %v799 = vpop.f32.mrf.mxu0
        %v800 = vadd.f32 0.0, %v799
        %v801 = vpop.f32.mrf.mxu0
        %802 = vdwg.mxu0
        %v803 = vld [vmem:[%s2] sm:$0xff]
        %v805 = vperm.slane %v803, 0
        %v806 = vperm.slane %v803, 1
        %v807 = vperm.slane %v803, 2
        %v808 = vperm.slane %v803, 3
        %v809 = vperm.slane %v803, 4
        %v810 = vperm.slane %v803, 5
        %v811 = vperm.slane %v803, 6
        %v812 = vperm.slane %v803, 7
        %v821 = vadd.f32 %v683, %v805
        %v822 = vadd.f32 %v696, %v806
        %v823 = vadd.f32 %v709, %v807
        %v824 = vadd.f32 %v722, %v808
        %v825 = vadd.f32 %v735, %v809
        %v826 = vadd.f32 %v748, %v810
        %v827 = vadd.f32 %v761, %v811
        %v828 = vadd.f32 %v774, %v812
        %v829 = vtanh.pop %v821
        %v830 = vtanh.pop %v822
        %v831 = vtanh.pop %v823
        %v832 = vtanh.pop %v824
        %v833 = vtanh.pop %v825
        %v834 = vtanh.pop %v826
        %v835 = vtanh.pop %v827
        %v836 = vtanh.pop %v828
        %837 = vst [vmem:[%s178] sm:$0xff] %v829
        %838 = vst [vmem:[%s178 + $0x8] sm:$0xff] %v830
        %839 = vst [vmem:[%s178 + $0x10] sm:$0xff] %v831
        %840 = vst [vmem:[%s178 + $0x18] sm:$0xff] %v832
        %841 = vst [vmem:[%s178 + $0x20] sm:$0xff] %v833
        %842 = vst [vmem:[%s178 + $0x28] sm:$0xff] %v834
        %843 = vst [vmem:[%s178 + $0x30] sm:$0xff] %v835
        %844 = vst [vmem:[%s178 + $0x38] sm:$0xff] %v836
        %845 = vst [vmem:[%s178 + $0x40] sm:$0xff] %v787
        %vm846 = vcmask 588800
        %847 = vst.msk [vmem:[%s178 + $0x48] sm:$0xff] %vm846, %v800
        %s848 = sand.u32 %s94, 1
        %s849 = scalar_lea.sflag [#allocation4], %s848
        %s850 = sand.u32 %s94, 1
        %s851 = smul.addr %s850, 80
        %s852 = scalar_lea.vmem [#allocation5], %s851
        // Predicated region
        $region37: #{tpu_custom_call.1} parent=31 // pred_check
          %p853 = pneg %p104
        $region38: #{tpu_custom_call.1} parent=31 // pred_check_branch
          %855 = sbr.rel (%p853) target = $region40
        $region39: #{tpu_custom_call.1} parent=31 // pred_region
          %857 = vsyncadd %s849, 0
          %s858 = smul.addr %s18, 10
          %s859 = smul.addr %s858, 8
          %s860 = scalar_lea.hbm %s3, %s859
          %s862 = sshll.u32 %s852, 4
          %s863 = int_to_ptr.vmem [resolvable:$true] %s862
          %s864 = sshll.u32 %s860, 4
          %s865 = int_to_ptr.hbm [resolvable:$true] %s864
          %867 = dma.vmem_to_hbm [thread:$0]  %s863, 1280, %s865, %s849
        $region40: #{tpu_custom_call.1} parent=31 // pred_fallthru
          _
      $region32: #{tpu_custom_call.1} parent=5 // pred_fallthru
        _
      %p868 = scmp.le.s32.totalorder 2, %s13
      // Predicated region
      $region41: #{tpu_custom_call.1} parent=5 // pred_check
        %p869 = pneg %p868
      $region42: #{tpu_custom_call.1} parent=5 // pred_check_branch
        %871 = sbr.rel (%p869) target = $region44
      $region43: #{tpu_custom_call.1} parent=5 // pred_region
        %s872 = ssub.s32 %s13, 2
        // Predicated region
        $region45: #{tpu_custom_call.1} parent=43 // pred_check
          %p873 = pneg %p110
        $region46: #{tpu_custom_call.1} parent=43 // pred_check_branch
          %875 = sbr.rel (%p873) target = $region48
        $region47: #{tpu_custom_call.1} parent=43 // pred_region
          %s876 = sand.u32 %s95, 1
          %s877 = scalar_lea.sflag [#allocation4], %s876
          %s878 = sand.u32 %s95, 1
          %s879 = smul.addr %s878, 80
          %s880 = scalar_lea.vmem [#allocation5], %s879
          %882 = dma.done %s877, 1280
        $region48: #{tpu_custom_call.1} parent=43 // pred_fallthru
          _
      $region44: #{tpu_custom_call.1} parent=5 // pred_fallthru
        _
    $region6: #{tpu_custom_call.1} parent=1 // loop_footer
      %s17 = sadd.s32 1, %s13
    $region7: #{tpu_custom_call.1} parent=1 // loop_footer_branch
      %12 = sbr.rel target = $region3
    $region8: #{tpu_custom_call.1} parent=1 // loop_exit
      _
    %883 = vsyncpa [#allocation3], 1
    %s884 = scalar_lea.sflag [#allocation3], 1
    %885 = vsyncpa %s884, 1
    %886 = vsyncpa [#allocation4], 1
    %s887 = scalar_lea.sflag [#allocation4], 1
    %888 = vsyncpa %s887, 1

</llo_original>
